<compile_context>
chip_gen: v7x
topology: tpu7x:2x2x1
jax: 0.10.0
libtpu: 0.0.40
codegen_flags: <defaults>
</compile_context>

<pallas_src>
import jax
import jax.numpy as jnp
from jax import lax
from jax.experimental import pallas as pl
from jax.experimental.pallas import tpu as pltpu

SMOOTH = 0.0001


def _make_kernel(total_rows: int, tile_rows: int, num_chunks: int):
    # Mask is only needed when the last D-chunk is partial (out-of-bounds block
    # reads are unspecified, so they must not reach the reductions).
    needs_mask = (num_chunks * tile_rows) != total_rows

    def kernel(x_ref, t_ref, w_ref, out_ref, acc_ref):
        k = pl.program_id(1)

        @pl.when(k == 0)
        def _():
            acc_ref[0] = jnp.float32(0.0)  # numerator   (sum x*t*w)
            acc_ref[1] = jnp.float32(0.0)  # denominator (sum x*w + sum t*w)

        # Cast on the VPU (free); HBM/DMA stays in the caller's (possibly narrow) dtype.
        x = x_ref[...].astype(jnp.float32)
        t = t_ref[...].astype(jnp.float32)
        w = w_ref[...].astype(jnp.float32)

        if needs_mask:
            rows_left = total_rows - k * tile_rows
            row_ids = lax.broadcasted_iota(jnp.int32, x.shape, 1)
            m = row_ids < rows_left
            zero = jnp.float32(0.0)
            x = jnp.where(m, x, zero)
            t = jnp.where(m, t, zero)
            w = jnp.where(m, w, zero)

        # Fused partial sums: 3 muls + 1 add per element, 2 full reductions.
        xw = x * w
        acc_ref[0] = acc_ref[0] + jnp.sum(xw * t)
        acc_ref[1] = acc_ref[1] + jnp.sum(w * (x + t))

        @pl.when(k == num_chunks - 1)
        def _():
            dice = (2.0 * acc_ref[0] + SMOOTH) / (acc_ref[1] + SMOOTH)
            out_ref[...] = jnp.full(out_ref.shape, dice, dtype=jnp.float32)

    return kernel


def weight_dice_loss(inp, target, weights, *, max_tile_rows: int = 1024):
    """Pallas implementation of Weight_DiceLoss.forward."""
    N = inp.shape[0]

    def _prep(a):
        # Keep original dtype in HBM; only pad D up to a multiple of 128 lanes.
        a = a.reshape(N, -1)
        D = a.shape[1]
        Dp = ((D + 127) // 128) * 128
        if Dp != D:
            a = jnp.pad(a, ((0, 0), (0, Dp - D)))  # zero pad is exact (all terms are products)
        return a.reshape(N, Dp // 128, 128)

    x = _prep(inp)
    t = _prep(target)
    w = _prep(weights)
    R = x.shape[1]  # rows of 128 lanes per sample

    if R <= max_tile_rows:
        TR, KC = R, 1                 # single chunk: full second-to-last dim (no 8-multiple needed)
    else:
        TR = max_tile_rows            # multiple of 8 -> satisfies (8,128) tiling for sub-blocks
        KC = (R + TR - 1) // TR

    dice_tiles = pl.pallas_call(
        _make_kernel(R, TR, KC),
        out_shape=jax.ShapeDtypeStruct((N, 8, 128), jnp.float32),
        grid_spec=pltpu.PrefetchScalarGridSpec(
            num_scalar_prefetch=0,
            grid=(N, KC),
            in_specs=[
                pl.BlockSpec((1, TR, 128), lambda b, k: (b, k, 0)),
                pl.BlockSpec((1, TR, 128), lambda b, k: (b, k, 0)),
                pl.BlockSpec((1, TR, 128), lambda b, k: (b, k, 0)),
            ],
            out_specs=pl.BlockSpec((1, 8, 128), lambda b, k: (b, 0, 0)),
            scratch_shapes=[pltpu.SMEM((2,), jnp.float32)],
        ),
        compiler_params=pltpu.CompilerParams(
            # batch axis independent (per-sample output block) -> shardable across TCs on v7x;
            # chunk axis carries the SMEM partial sums -> arbitrary, kept last.
            dimension_semantics=("parallel", "arbitrary"),
        ),
    )(x, t, w)

    dice = dice_tiles[:, 0, 0]
    return 1.0 - jnp.sum(dice) / jnp.float32(N)


def _reference(inp, target, weights):
    N = inp.shape[0]
    xf = inp.reshape(N, -1).astype(jnp.float32)
    tf = target.reshape(N, -1).astype(jnp.float32)
    wf = weights.reshape(N, -1).astype(jnp.float32)
    inter = (xf * tf * wf).sum(1)
    dice = (2.0 * inter + SMOOTH) / ((xf * wf).sum(1) + (tf * wf).sum(1) + SMOOTH)
    return 1.0 - dice.sum() / N


if __name__ == "__main__":
    key = jax.random.PRNGKey(0)
    k1, k2, k3 = jax.random.split(key, 3)

    N, C, H, W = 2, 4, 16, 16
    # predictions in (0,1), binary targets, positive weights
    inp = jax.nn.sigmoid(jax.random.normal(k1, (N, C, H, W), dtype=jnp.float32))
    target = (jax.random.uniform(k2, (N, C, H, W)) > 0.5).astype(jnp.float32)
    weights = jax.random.uniform(k3, (N, C, H, W), dtype=jnp.float32) + 0.5

    loss = weight_dice_loss(inp, target, weights)
    jax.block_until_ready(loss)

    ref = _reference(inp, target, weights)
    assert jnp.allclose(loss, ref, atol=1e-5, rtol=1e-5), (loss, ref)

    print("KERNEL_OK")
</pallas_src>

<mosaic_0001>
module attributes {stable_mosaic.version = 11 : i64} {
  func.func @kernel(%arg0: i32, %arg1: i32, %arg2: memref<1x8x128xf32, #tpu.memory_space<vmem>>, %arg3: memref<1x8x128xf32, #tpu.memory_space<vmem>>, %arg4: memref<1x8x128xf32, #tpu.memory_space<vmem>>, %arg5: memref<1x8x128xf32, #tpu.memory_space<vmem>>, %arg6: memref<2xf32, #tpu.memory_space<smem>>) attributes {dimension_semantics = [#tpu.dimension_semantics<parallel>, #tpu.dimension_semantics<arbitrary>], iteration_bounds = array<i64: 2, 1>, scalar_prefetch = 0 : i64, scratch_operands = 1 : i64, tpu.core_type = #tpu.core_type<tc>, window_params = [{transform_indices = @transform_0, window_bounds = array<i64: 1, 8, 128>}, {transform_indices = @transform_1, window_bounds = array<i64: 1, 8, 128>}, {transform_indices = @transform_2, window_bounds = array<i64: 1, 8, 128>}, {transform_indices = @transform_3, window_bounds = array<i64: 1, 8, 128>}]} {
    %c0_i32 = arith.constant 0 : i32
    %0 = arith.cmpi eq, %arg1, %c0_i32 : i32
    %1 = arith.extui %0 : i1 to i32
    %c0_i32_0 = arith.constant 0 : i32
    %2 = arith.cmpi ne, %1, %c0_i32_0 : i32
    scf.if %2 {
      %cst_15 = arith.constant 0.000000e+00 : f32
      %c0_16 = arith.constant 0 : index
      %27 = memref.load %arg6[%c0_16] : memref<2xf32, #tpu.memory_space<smem>>
      memref.store %cst_15, %arg6[%c0_16] : memref<2xf32, #tpu.memory_space<smem>>
      %cst_17 = arith.constant 0.000000e+00 : f32
      %c1_18 = arith.constant 1 : index
      %28 = memref.load %arg6[%c1_18] : memref<2xf32, #tpu.memory_space<smem>>
      memref.store %cst_17, %arg6[%c1_18] : memref<2xf32, #tpu.memory_space<smem>>
    } else {
    }
    %c0 = arith.constant 0 : index
    %c0_1 = arith.constant 0 : index
    %c0_2 = arith.constant 0 : index
    %3 = vector.load %arg2[%c0, %c0_1, %c0_2] : memref<1x8x128xf32, #tpu.memory_space<vmem>>, vector<1x8x128xf32>
    %c0_3 = arith.constant 0 : index
    %c0_4 = arith.constant 0 : index
    %c0_5 = arith.constant 0 : index
    %4 = vector.load %arg3[%c0_3, %c0_4, %c0_5] : memref<1x8x128xf32, #tpu.memory_space<vmem>>, vector<1x8x128xf32>
    %c0_6 = arith.constant 0 : index
    %c0_7 = arith.constant 0 : index
    %c0_8 = arith.constant 0 : index
    %5 = vector.load %arg4[%c0_6, %c0_7, %c0_8] : memref<1x8x128xf32, #tpu.memory_space<vmem>>, vector<1x8x128xf32>
    %6 = arith.mulf %3, %5 : vector<1x8x128xf32>
    %c0_9 = arith.constant 0 : index
    %7 = memref.load %arg6[%c0_9] : memref<2xf32, #tpu.memory_space<smem>>
    %8 = arith.mulf %6, %4 : vector<1x8x128xf32>
    %9 = vector.shape_cast %8 : vector<1x8x128xf32> to vector<1x1x8x128xf32>
    %cst = arith.constant dense<0.000000e+00> : vector<1xf32>
    %10 = vector.multi_reduction <add>, %9, %cst [1, 2, 3] : vector<1x1x8x128xf32> to vector<1xf32>
    %11 = vector.shape_cast %10 : vector<1xf32> to vector<1x1x1x1xf32>
    %12 = vector.extract %11[0, 0, 0, 0] : f32 from vector<1x1x1x1xf32>
    %13 = arith.addf %7, %12 : f32
    %c0_10 = arith.constant 0 : index
    %14 = memref.load %arg6[%c0_10] : memref<2xf32, #tpu.memory_space<smem>>
    memref.store %13, %arg6[%c0_10] : memref<2xf32, #tpu.memory_space<smem>>
    %c1 = arith.constant 1 : index
    %15 = memref.load %arg6[%c1] : memref<2xf32, #tpu.memory_space<smem>>
    %16 = arith.addf %3, %4 : vector<1x8x128xf32>
    %17 = arith.mulf %5, %16 : vector<1x8x128xf32>
    %18 = vector.shape_cast %17 : vector<1x8x128xf32> to vector<1x1x8x128xf32>
    %cst_11 = arith.constant dense<0.000000e+00> : vector<1xf32>
    %19 = vector.multi_reduction <add>, %18, %cst_11 [1, 2, 3] : vector<1x1x8x128xf32> to vector<1xf32>
    %20 = vector.shape_cast %19 : vector<1xf32> to vector<1x1x1x1xf32>
    %21 = vector.extract %20[0, 0, 0, 0] : f32 from vector<1x1x1x1xf32>
    %22 = arith.addf %15, %21 : f32
    %c1_12 = arith.constant 1 : index
    %23 = memref.load %arg6[%c1_12] : memref<2xf32, #tpu.memory_space<smem>>
    memref.store %22, %arg6[%c1_12] : memref<2xf32, #tpu.memory_space<smem>>
    %c0_i32_13 = arith.constant 0 : i32
    %24 = arith.cmpi eq, %arg1, %c0_i32_13 : i32
    %25 = arith.extui %24 : i1 to i32
    %c0_i32_14 = arith.constant 0 : i32
    %26 = arith.cmpi ne, %25, %c0_i32_14 : i32
    scf.if %26 {
      %c0_15 = arith.constant 0 : index
      %27 = memref.load %arg6[%c0_15] : memref<2xf32, #tpu.memory_space<smem>>
      %cst_16 = arith.constant 2.000000e+00 : f32
      %28 = arith.mulf %cst_16, %27 : f32
      %cst_17 = arith.constant 9.99999974E-5 : f32
      %29 = arith.addf %28, %cst_17 : f32
      %c1_18 = arith.constant 1 : index
      %30 = memref.load %arg6[%c1_18] : memref<2xf32, #tpu.memory_space<smem>>
      %cst_19 = arith.constant 9.99999974E-5 : f32
      %31 = arith.addf %30, %cst_19 : f32
      %32 = arith.divf %29, %31 : f32
      %33 = vector.broadcast %32 : f32 to vector<1x8x128xf32>
      %c0_20 = arith.constant 0 : index
      %c0_21 = arith.constant 0 : index
      %c0_22 = arith.constant 0 : index
      %34 = vector.load %arg5[%c0_20, %c0_21, %c0_22] : memref<1x8x128xf32, #tpu.memory_space<vmem>>, vector<1x8x128xf32>
      tpu.vector_store %arg5[%c0_20, %c0_21, %c0_22], %33 {strides = array<i32>} : memref<1x8x128xf32, #tpu.memory_space<vmem>>, vector<1x8x128xf32>,
    } else {
    }
    return
  }
  func.func @transform_0(%arg0: i32, %arg1: i32) -> (i32, i32, i32) {
    %c0_i32 = arith.constant 0 : i32
    %c0_i32_0 = arith.constant 0 : i32
    return %arg0, %arg1, %c0_i32 : i32, i32, i32
  }
  func.func @transform_1(%arg0: i32, %arg1: i32) -> (i32, i32, i32) {
    %c0_i32 = arith.constant 0 : i32
    %c0_i32_0 = arith.constant 0 : i32
    return %arg0, %arg1, %c0_i32 : i32, i32, i32
  }
  func.func @transform_2(%arg0: i32, %arg1: i32) -> (i32, i32, i32) {
    %c0_i32 = arith.constant 0 : i32
    %c0_i32_0 = arith.constant 0 : i32
    return %arg0, %arg1, %c0_i32 : i32, i32, i32
  }
  func.func @transform_3(%arg0: i32, %arg1: i32) -> (i32, i32, i32) {
    %c0_i32 = arith.constant 0 : i32
    %c0_i32_0 = arith.constant 0 : i32
    %c0_i32_1 = arith.constant 0 : i32
    return %arg0, %c0_i32, %c0_i32_0 : i32, i32, i32
  }
}

</mosaic_0001>

<llo_original>
// kernel: tpu_custom_call.1
$region0: #{tpu_custom_call.1}
  #allocation0 [shape = 'u32[]', space=smem, size = 0x4, offset = 0x4, fixed_abs, tag = 'smem constant byte address 0x4 - core index']
  #allocation1 [shape = 'u32[144,128]{1,0:T(1,128)}', space=vmem, size = 0x12000, scoped, tag = 'internal scratch']
  #allocation2 [shape = 'f32[2]{0:T(128)}', space=smem, size = 0x200, scoped, tag = 'scratch operand']
  %s0 = inlined_call_operand.hbm [shape: f32[2,8,128], index: 0, kind: input, shape index: {}]
  %s1 = inlined_call_operand.hbm [shape: f32[2,8,128], index: 1, kind: input, shape index: {}]
  %s2 = inlined_call_operand.hbm [shape: f32[2,8,128], index: 2, kind: input, shape index: {}]
  %s3 = inlined_call_operand.hbm [shape: f32[2,8,128], index: 3, kind: output, shape index: {}]
  %s4 = sld [smem:[#allocation0]]
  $region65: #{tpu_custom_call.1} parent=0
    _
  %s6 = ssub.s32 1, %s4
  %s7 = scalar_select 0, %s6, %s4
  $region1: #{tpu_custom_call.1} parent=0
    #allocation3 [shape = 'u8[8192]{0}', space=vmem, size = 0x2000, scoped, tag = 'input window, operand 0']
    #allocation4 [shape = 's32[2]{0}', space=sflag, size = 0x8, scoped, tag = 'scoped memory for tpu_custom_call.1']
    #allocation5 [shape = 's32[2]{0}', space=sflag, size = 0x8, scoped, tag = 'scoped memory for tpu_custom_call.1']
    #allocation6 [shape = 'u8[8192]{0}', space=vmem, size = 0x2000, scoped, tag = 'input window, operand 1']
    #allocation7 [shape = 's32[2]{0}', space=sflag, size = 0x8, scoped, tag = 'scoped memory for tpu_custom_call.1']
    #allocation8 [shape = 'u8[8192]{0}', space=vmem, size = 0x2000, scoped, tag = 'input window, operand 2']
    #allocation9 [shape = 'u8[8192]{0}', space=vmem, size = 0x2000, scoped, tag = 'output window, operand 0']
    %8 = vsyncpa [#allocation4], 0
    %s9 = scalar_lea.sflag [#allocation4], 1
    %10 = vsyncpa %s9, 0
    %11 = vsyncpa [#allocation7], 0
    %s12 = scalar_lea.sflag [#allocation7], 1
    %13 = vsyncpa %s12, 0
    %14 = vsyncpa [#allocation5], 0
    %s15 = scalar_lea.sflag [#allocation5], 1
    %16 = vsyncpa %s15, 0
    loop: start=0, step=1, limit=4
    $region2: #{tpu_custom_call.1} parent=1 // loop_pre_header
      _
    $region3: #{tpu_custom_call.1} parent=1 // loop_header
      %s18 = sphi 0, %s22
      %p19 = scmp.ge.s32.totalorder %s18, 4
      %s25 = sphi 0, %s37
      %s26 = sphi 0, %s33
      %s27 = sphi 0, %s25
      %s28 = sphi 0, %s26
      %s29 = sphi 0, %s27
      %s30 = sphi 0, %s28
      %s42 = sphi 0, %s44
      %s45 = sphi 0, %s42
      %s46 = sphi 0, %s45
      %s62 = sphi 0, %s46
      %s70 = sphi 0, %s72
      %s73 = sphi 0, %s70
      %s74 = sphi 0, %s73
      %s90 = sphi 0, %s74
      %s98 = sphi 0, %s100
      %s101 = sphi 0, %s98
      %s102 = sphi 0, %s101
      %s118 = sphi 0, %s102
      %s124 = sphi 0, %s126
      %s127 = sphi 0, %s124
      %s128 = sphi 0, %s127
      %s144 = sphi 0, %s128
    $region4: #{tpu_custom_call.1} parent=1 // loop_header_branch
      %21 = sbr.rel (%p19) target = $region8
    $region5: #{tpu_custom_call.1} parent=1 // loop_body
      %s23 = ssub.s32 %s18, 1
      %s24 = ssub.s32 %s18, 2
      %s31 = sadd.s32 1, %s26
      %p32 = scmp.ge.s32.totalorder %s31, 1
      %s33 = scalar_select %p32, 0, %s31
      %s34 = sadd.s32 1, %s25
      %s35 = scalar_select %p32, %s34, %s25
      %p36 = scmp.ge.s32.totalorder %s35, 2
      %s37 = scalar_select %p36, 0, %s35
      %s38 = ssub.s32 %s25, %s37
      %s39 = ssub.s32 %s26, %s33
      %s40 = sor.u32 %s38, %s39
      %p41 = scmp.eq.s32.totalorder %s40, 0
      %s43 = sadd.s32 %s42, 1
      %s44 = scalar_select %p41, %s42, %s43
      %p47 = pneg %p41
      %p48 = scmp.eq.s32.totalorder %s18, 1
      %p49 = por %p47, %p48
      %p50 = scmp.ne.s32.totalorder %s42, %s45
      %p51 = scmp.eq.s32.totalorder %s18, 0
      %p52 = por %p50, %p51
      %p53 = scmp.ne.s32.totalorder %s42, %s45
      %p54 = scmp.eq.s32.totalorder %s23, 1
      %p55 = por %p53, %p54
      %p56 = scmp.ne.s32.totalorder %s45, %s46
      %p57 = scmp.eq.s32.totalorder %s23, 0
      %p58 = por %p56, %p57
      %p59 = scmp.ne.s32.totalorder %s45, %s46
      %p60 = scmp.eq.s32.totalorder %s24, 1
      %p61 = por %p59, %p60
      %p63 = scmp.ne.s32.totalorder %s46, %s62
      %p64 = scmp.eq.s32.totalorder %s24, 0
      %p65 = por %p63, %p64
      %s66 = ssub.s32 %s25, %s37
      %s67 = ssub.s32 %s26, %s33
      %s68 = sor.u32 %s66, %s67
      %p69 = scmp.eq.s32.totalorder %s68, 0
      %s71 = sadd.s32 %s70, 1
      %s72 = scalar_select %p69, %s70, %s71
      %p75 = pneg %p69
      %p76 = scmp.eq.s32.totalorder %s18, 1
      %p77 = por %p75, %p76
      %p78 = scmp.ne.s32.totalorder %s70, %s73
      %p79 = scmp.eq.s32.totalorder %s18, 0
      %p80 = por %p78, %p79
      %p81 = scmp.ne.s32.totalorder %s70, %s73
      %p82 = scmp.eq.s32.totalorder %s23, 1
      %p83 = por %p81, %p82
      %p84 = scmp.ne.s32.totalorder %s73, %s74
      %p85 = scmp.eq.s32.totalorder %s23, 0
      %p86 = por %p84, %p85
      %p87 = scmp.ne.s32.totalorder %s73, %s74
      %p88 = scmp.eq.s32.totalorder %s24, 1
      %p89 = por %p87, %p88
      %p91 = scmp.ne.s32.totalorder %s74, %s90
      %p92 = scmp.eq.s32.totalorder %s24, 0
      %p93 = por %p91, %p92
      %s94 = ssub.s32 %s25, %s37
      %s95 = ssub.s32 %s26, %s33
      %s96 = sor.u32 %s94, %s95
      %p97 = scmp.eq.s32.totalorder %s96, 0
      %s99 = sadd.s32 %s98, 1
      %s100 = scalar_select %p97, %s98, %s99
      %p103 = pneg %p97
      %p104 = scmp.eq.s32.totalorder %s18, 1
      %p105 = por %p103, %p104
      %p106 = scmp.ne.s32.totalorder %s98, %s101
      %p107 = scmp.eq.s32.totalorder %s18, 0
      %p108 = por %p106, %p107
      %p109 = scmp.ne.s32.totalorder %s98, %s101
      %p110 = scmp.eq.s32.totalorder %s23, 1
      %p111 = por %p109, %p110
      %p112 = scmp.ne.s32.totalorder %s101, %s102
      %p113 = scmp.eq.s32.totalorder %s23, 0
      %p114 = por %p112, %p113
      %p115 = scmp.ne.s32.totalorder %s101, %s102
      %p116 = scmp.eq.s32.totalorder %s24, 1
      %p117 = por %p115, %p116
      %p119 = scmp.ne.s32.totalorder %s102, %s118
      %p120 = scmp.eq.s32.totalorder %s24, 0
      %p121 = por %p119, %p120
      %s122 = ssub.s32 %s25, %s37
      %p123 = scmp.eq.s32.totalorder %s122, 0
      %s125 = sadd.s32 %s124, 1
      %s126 = scalar_select %p123, %s124, %s125
      %p129 = pneg %p123
      %p130 = scmp.eq.s32.totalorder %s18, 1
      %p131 = por %p129, %p130
      %p132 = scmp.ne.s32.totalorder %s124, %s127
      %p133 = scmp.eq.s32.totalorder %s18, 0
      %p134 = por %p132, %p133
      %p135 = scmp.ne.s32.totalorder %s124, %s127
      %p136 = scmp.eq.s32.totalorder %s23, 1
      %p137 = por %p135, %p136
      %p138 = scmp.ne.s32.totalorder %s127, %s128
      %p139 = scmp.eq.s32.totalorder %s23, 0
      %p140 = por %p138, %p139
      %p141 = scmp.ne.s32.totalorder %s127, %s128
      %p142 = scmp.eq.s32.totalorder %s24, 1
      %p143 = por %p141, %p142
      %p145 = scmp.ne.s32.totalorder %s128, %s144
      %p146 = scmp.eq.s32.totalorder %s24, 0
      %p147 = por %p145, %p146
      %p148 = scmp.le.s32.totalorder 1, %s18
      %p149 = scmp.lt.s32.totalorder %s18, 3
      %p150 = pnand %p148, %p149
      %p151 = pneg %p150
      // Predicated region
      $region9: #{tpu_custom_call.1} parent=5 // pred_check
        _
      $region10: #{tpu_custom_call.1} parent=5 // pred_check_branch
        %153 = sbr.rel (%p150) target = $region12
      $region11: #{tpu_custom_call.1} parent=5 // pred_region
        %s154 = ssub.s32 %s18, 1
      $region12: #{tpu_custom_call.1} parent=5 // pred_fallthru
        _
      %p155 = scmp.lt.s32.totalorder %s18, 2
      // Predicated region
      $region13: #{tpu_custom_call.1} parent=5 // pred_check
        %p156 = pneg %p155
      $region14: #{tpu_custom_call.1} parent=5 // pred_check_branch
        %158 = sbr.rel (%p156) target = $region16
      $region15: #{tpu_custom_call.1} parent=5 // pred_region
        // Predicated region
        $region17: #{tpu_custom_call.1} parent=15 // pred_check
          %p159 = pneg %p52
        $region18: #{tpu_custom_call.1} parent=15 // pred_check_branch
          %161 = sbr.rel (%p159) target = $region20
        $region19: #{tpu_custom_call.1} parent=15 // pred_region
          %s162 = sand.u32 %s42, 1
          %s163 = scalar_lea.sflag [#allocation4], %s162
          %s164 = sand.u32 %s42, 1
          %s165 = smul.addr %s164, 8
          %s166 = scalar_lea.vmem [#allocation3], %s165
          %s168 = ssub.s32 128, 128
          %169 = vsyncadd %s163, %s168
          %s170 = sadd.s32 %s26, %s25
          %s171 = smul.addr %s170, 128
          %s172 = scalar_lea.hbm %s0, %s171
          %s174 = sshll.u32 %s166, 4
          %s175 = int_to_ptr.vmem [resolvable:$true] %s174
          %177 = dma.hbm_to_vmem [thread:$0]  %s172, 128, %s175, %s163
        $region20: #{tpu_custom_call.1} parent=15 // pred_fallthru
          _
        // Predicated region
        $region21: #{tpu_custom_call.1} parent=15 // pred_check
          %p178 = pneg %p80
        $region22: #{tpu_custom_call.1} parent=15 // pred_check_branch
          %180 = sbr.rel (%p178) target = $region24
        $region23: #{tpu_custom_call.1} parent=15 // pred_region
          %s181 = sand.u32 %s18, 1
          %s182 = scalar_lea.sflag [#allocation7], %s181
          %s183 = sand.u32 %s70, 1
          %s184 = smul.addr %s183, 8
          %s185 = scalar_lea.vmem [#allocation6], %s184
          %s187 = ssub.s32 128, 128
          %188 = vsyncadd %s182, %s187
          %s189 = sadd.s32 %s26, %s25
          %s190 = smul.addr %s189, 128
          %s191 = scalar_lea.hbm %s1, %s190
          %s193 = sshll.u32 %s185, 4
          %s194 = int_to_ptr.vmem [resolvable:$true] %s193
          %196 = dma.hbm_to_vmem [thread:$0]  %s191, 128, %s194, %s182
        $region24: #{tpu_custom_call.1} parent=15 // pred_fallthru
          _
        // Predicated region
        $region25: #{tpu_custom_call.1} parent=15 // pred_check
          %p197 = pneg %p108
        $region26: #{tpu_custom_call.1} parent=15 // pred_check_branch
          %199 = sbr.rel (%p197) target = $region28
        $region27: #{tpu_custom_call.1} parent=15 // pred_region
          %s200 = sand.u32 %s18, 1
          %s201 = scalar_lea.sflag [#allocation7], %s200
          %s202 = sand.u32 %s98, 1
          %s203 = smul.addr %s202, 8
          %s204 = scalar_lea.vmem [#allocation8], %s203
          %s206 = ssub.s32 128, 128
          %207 = vsyncadd %s201, %s206
          %s208 = sadd.s32 %s26, %s25
          %s209 = smul.addr %s208, 128
          %s210 = scalar_lea.hbm %s2, %s209
          %s212 = sshll.u32 %s204, 4
          %s213 = int_to_ptr.vmem [resolvable:$true] %s212
          %215 = dma.hbm_to_vmem [thread:$0]  %s210, 128, %s213, %s201
        $region28: #{tpu_custom_call.1} parent=15 // pred_fallthru
          _
      $region16: #{tpu_custom_call.1} parent=5 // pred_fallthru
        _
      %p216 = scmp.le.s32.totalorder 1, %s18
      %p217 = scmp.lt.s32.totalorder %s18, 3
      %p218 = pnand %p216, %p217
      %p219 = pneg %p218
      // Predicated region
      $region29: #{tpu_custom_call.1} parent=5 // pred_check
        _
      $region30: #{tpu_custom_call.1} parent=5 // pred_check_branch
        %221 = sbr.rel (%p218) target = $region32
      $region31: #{tpu_custom_call.1} parent=5 // pred_region
        %s222 = ssub.s32 %s18, 1
        %s223 = sand.u32 %s45, 1
        %s224 = scalar_lea.sflag [#allocation4], %s223
        %s225 = sand.u32 %s45, 1
        %s226 = smul.addr %s225, 8
        %s227 = scalar_lea.vmem [#allocation3], %s226
        // Predicated region
        $region33: #{tpu_custom_call.1} parent=31 // pred_check
          %p228 = pneg %p58
        $region34: #{tpu_custom_call.1} parent=31 // pred_check_branch
          %230 = sbr.rel (%p228) target = $region36
        $region35: #{tpu_custom_call.1} parent=31 // pred_region
          %231 = dma.done %s224, 128
        $region36: #{tpu_custom_call.1} parent=31 // pred_fallthru
          _
        %s232 = sand.u32 %s23, 1
        %s233 = scalar_lea.sflag [#allocation7], %s232
        %s234 = sand.u32 %s73, 1
        %s235 = smul.addr %s234, 8
        %s236 = scalar_lea.vmem [#allocation6], %s235
        // Predicated region
        $region37: #{tpu_custom_call.1} parent=31 // pred_check
          %p237 = pneg %p86
        $region38: #{tpu_custom_call.1} parent=31 // pred_check_branch
          %239 = sbr.rel (%p237) target = $region40
        $region39: #{tpu_custom_call.1} parent=31 // pred_region
          %240 = dma.done %s233, 128
        $region40: #{tpu_custom_call.1} parent=31 // pred_fallthru
          _
        %s241 = sand.u32 %s23, 1
        %s242 = scalar_lea.sflag [#allocation7], %s241
        %s243 = sand.u32 %s101, 1
        %s244 = smul.addr %s243, 8
        %s245 = scalar_lea.vmem [#allocation8], %s244
        // Predicated region
        $region41: #{tpu_custom_call.1} parent=31 // pred_check
          %p246 = pneg %p114
        $region42: #{tpu_custom_call.1} parent=31 // pred_check_branch
          %248 = sbr.rel (%p246) target = $region44
        $region43: #{tpu_custom_call.1} parent=31 // pred_region
          %249 = dma.done %s242, 128
        $region44: #{tpu_custom_call.1} parent=31 // pred_fallthru
          _
        %s250 = sand.u32 %s45, 1
        %s251 = scalar_lea.sflag [#allocation4], %s250
        %s252 = sand.u32 %s45, 1
        %s253 = smul.addr %s252, 8
        %s254 = scalar_lea.vmem [#allocation3], %s253
        %p255 = pneg %p58
        %p256 = pneg %p55
        %s257 = sand.u32 %s23, 1
        %s258 = scalar_lea.sflag [#allocation7], %s257
        %s259 = sand.u32 %s73, 1
        %s260 = smul.addr %s259, 8
        %s261 = scalar_lea.vmem [#allocation6], %s260
        %p262 = pneg %p86
        %p263 = pneg %p83
        %s264 = sand.u32 %s23, 1
        %s265 = scalar_lea.sflag [#allocation7], %s264
        %s266 = sand.u32 %s101, 1
        %s267 = smul.addr %s266, 8
        %s268 = scalar_lea.vmem [#allocation8], %s267
        %p269 = pneg %p114
        %p270 = pneg %p111
        %p271 = pneg %p140
        %p272 = pneg %p137
        %s273 = sand.u32 %s127, 1
        %s274 = scalar_lea.sflag [#allocation5], %s273
        %s275 = sand.u32 %s127, 1
        %s276 = smul.addr %s275, 8
        %s277 = scalar_lea.vmem [#allocation9], %s276
        %p278 = scmp.eq.s32.totalorder %s28, 0
        // Predicated region
        $region45: #{tpu_custom_call.1} parent=31 // pred_check
          %p279 = pneg %p278
        $region46: #{tpu_custom_call.1} parent=31 // pred_check_branch
          %281 = sbr.rel (%p279) target = $region48
        $region47: #{tpu_custom_call.1} parent=31 // pred_region
          %s282 = scalar_lea.smem [#allocation2], 0
          %283 = sst [smem:[%s282]] 0.0
          %s284 = scalar_lea.smem [#allocation2], 1
          %285 = sst [smem:[%s284]] 0.0
        $region48: #{tpu_custom_call.1} parent=31 // pred_fallthru
          _
        %v286 = vld [vmem:[%s227] sm:$0xff]
        %v287 = vld [vmem:[%s236] sm:$0xff]
        %v288 = vld [vmem:[%s245] sm:$0xff]
        %v289 = vmul.f32 %v286, %v288
        %s290 = sld [smem:[#allocation2]]
        %v291 = vmul.f32 %v289, %v287
        %292 = vadd.xlane.f32.xlu0 %v291
        %v293 = vpop.xlane.xlu0 %292
        %v294 = vrot.slane %v293, 4
        %v295 = vadd.f32 %v293, %v294
        %v296 = vrot.slane %v295, 2
        %v297 = vadd.f32 %v295, %v296
        %v298 = vrot.slane %v297, 1
        %v299 = vadd.f32 %v297, %v298
        %s300 = vtos %v299
        %s301 = sadd.f32 %s290, %s300
        %s302 = scalar_lea.smem [#allocation2], 0
        %303 = sst [smem:[%s302]] %s301
        %s304 = sld [smem:[#allocation2 + $0x1]]
        %v305 = vadd.f32 %v286, %v287
        %v306 = vmul.f32 %v288, %v305
        %307 = vadd.xlane.f32.xlu0 %v306
        %v308 = vpop.xlane.xlu0 %307
        %v309 = vrot.slane %v308, 4
        %v310 = vadd.f32 %v308, %v309
        %v311 = vrot.slane %v310, 2
        %v312 = vadd.f32 %v310, %v311
        %v313 = vrot.slane %v312, 1
        %v314 = vadd.f32 %v312, %v313
        %s315 = vtos %v314
        %s316 = sadd.f32 %s304, %s315
        %s317 = scalar_lea.smem [#allocation2], 1
        %318 = sst [smem:[%s317]] %s316
        // Predicated region
        $region49: #{tpu_custom_call.1} parent=31 // pred_check
          %p319 = pneg %p278
        $region50: #{tpu_custom_call.1} parent=31 // pred_check_branch
          %321 = sbr.rel (%p319) target = $region52
        $region51: #{tpu_custom_call.1} parent=31 // pred_region
          %s322 = sld [smem:[#allocation2]]
          %s323 = smul.f32 %s322, 2.0
          %s324 = sadd.f32 %s323, 0.0001
          %s325 = sld [smem:[#allocation2 + $0x1]]
          %s326 = sadd.f32 %s325, 0.0001
          %v327 = vstv %s326
          %v328 = vrcp.pop %v327
          %s329 = vtos %v328
          %s330 = smul.f32 %s324, %s329
          %v331 = vstv %s330
          %332 = vst [vmem:[%s277] sm:$0xff] %v331
        $region52: #{tpu_custom_call.1} parent=31 // pred_fallthru
          _
        %s333 = sand.u32 %s127, 1
        %s334 = scalar_lea.sflag [#allocation5], %s333
        %s335 = sand.u32 %s127, 1
        %s336 = smul.addr %s335, 8
        %s337 = scalar_lea.vmem [#allocation9], %s336
        // Predicated region
        $region53: #{tpu_custom_call.1} parent=31 // pred_check
          %p338 = pneg %p137
        $region54: #{tpu_custom_call.1} parent=31 // pred_check_branch
          %340 = sbr.rel (%p338) target = $region56
        $region55: #{tpu_custom_call.1} parent=31 // pred_region
          %s342 = ssub.s32 128, 128
          %343 = vsyncadd %s334, %s342
          %s344 = smul.addr %s27, 128
          %s345 = scalar_lea.hbm %s3, %s344
          %s347 = sshll.u32 %s337, 4
          %s348 = int_to_ptr.vmem [resolvable:$true] %s347
          %350 = dma.vmem_to_hbm [thread:$0]  %s348, 128, %s345, %s334
        $region56: #{tpu_custom_call.1} parent=31 // pred_fallthru
          _
      $region32: #{tpu_custom_call.1} parent=5 // pred_fallthru
        _
      %p351 = scmp.le.s32.totalorder 2, %s18
      // Predicated region
      $region57: #{tpu_custom_call.1} parent=5 // pred_check
        %p352 = pneg %p351
      $region58: #{tpu_custom_call.1} parent=5 // pred_check_branch
        %354 = sbr.rel (%p352) target = $region60
      $region59: #{tpu_custom_call.1} parent=5 // pred_region
        %s355 = ssub.s32 %s18, 2
        // Predicated region
        $region61: #{tpu_custom_call.1} parent=59 // pred_check
          %p356 = pneg %p143
        $region62: #{tpu_custom_call.1} parent=59 // pred_check_branch
          %358 = sbr.rel (%p356) target = $region64
        $region63: #{tpu_custom_call.1} parent=59 // pred_region
          %s359 = sand.u32 %s128, 1
          %s360 = scalar_lea.sflag [#allocation5], %s359
          %s361 = sand.u32 %s128, 1
          %s362 = smul.addr %s361, 8
          %s363 = scalar_lea.vmem [#allocation9], %s362
          %364 = dma.done %s360, 128
        $region64: #{tpu_custom_call.1} parent=59 // pred_fallthru
          _
      $region60: #{tpu_custom_call.1} parent=5 // pred_fallthru
        _
    $region6: #{tpu_custom_call.1} parent=1 // loop_footer
      %s22 = sadd.s32 1, %s18
    $region7: #{tpu_custom_call.1} parent=1 // loop_footer_branch
      %17 = sbr.rel target = $region3
    $region8: #{tpu_custom_call.1} parent=1 // loop_exit
      _
    %365 = vsyncpa [#allocation4], 1
    %s366 = scalar_lea.sflag [#allocation4], 1
    %367 = vsyncpa %s366, 1
    %368 = vsyncpa [#allocation7], 1
    %s369 = scalar_lea.sflag [#allocation7], 1
    %370 = vsyncpa %s369, 1
    %371 = vsyncpa [#allocation5], 1
    %s372 = scalar_lea.sflag [#allocation5], 1
    %373 = vsyncpa %s372, 1

</llo_original>
